<compile_context>
chip_gen: v5e
topology: v5e:2x2
jax: 0.10.0
libtpu: 0.0.40
codegen_flags: <defaults>
</compile_context>

<pallas_src>
import functools
import math

import jax
import jax.numpy as jnp
from jax.experimental import pallas as pl
from jax.experimental.pallas import tpu as pltpu


def _add_pe_kernel(x_ref, pe_ref, o_ref):
    # x_ref / o_ref block: (TS, D) (batch squeezed) or (TB, S, D) (batch folded).
    # pe_ref block: (TS, D) or (S, D) in f32.  Broadcasting handles both cases;
    # the add is done in f32 and rounded once to the output dtype.
    o_ref[...] = (x_ref[...].astype(jnp.float32) + pe_ref[...]).astype(o_ref.dtype)


@functools.lru_cache(maxsize=32)
def _pe_table(seq_len: int, d_model: int) -> jax.Array:
    """Registered-buffer equivalent: built once per (S, D), cached across calls."""
    position = jnp.arange(seq_len, dtype=jnp.float32)[:, None]               # (S, 1)
    div_term = jnp.exp(jnp.arange(0, d_model, 2, dtype=jnp.float32)
                       * -(math.log(10000.0) / d_model))                     # (D/2,)
    angle = position * div_term                                              # (S, D/2)
    # sin at even columns, cos at odd columns (interleave via stack+reshape,
    # avoids the two strided scatter ops).
    pe = jnp.stack([jnp.sin(angle), jnp.cos(angle)], axis=-1)                # (S, D/2, 2)
    return pe.reshape(seq_len, d_model)                                      # (S, D) f32


def _choose_blocks(B: int, S: int, D: int, dtype, block_bytes: int):
    """Pick block layout by total byte budget.

    Returns ("fold", TB, S)  -> block (TB, S, D), grid over batch blocks, or
            ("tile", 1, TS)  -> block (Squeezed, TS, D), grid (S-tiles, batch).
    """
    item = jnp.dtype(dtype).itemsize
    sublane = max(8, 32 // item)          # 8 f32, 16 bf16, 32 int8/fp8
    slab = S * D * item                   # one batch row
    if slab <= block_bytes:
        tb = max(1, min(B, block_bytes // max(1, slab)))
        return "fold", tb, S
    ts = block_bytes // max(1, D * item)
    ts = max(sublane, (ts // sublane) * sublane)
    ts = min(ts, S)
    return "tile", 1, ts


def positional_encoding(x: jax.Array, dropout_p: float = 0.1, *,
                        block_bytes: int = 2 << 20) -> jax.Array:
    """x: (batch, seq_len, d_model). Returns x + pe[:, :seq_len] (eval-mode dropout)."""
    B, S, D = x.shape
    pe = _pe_table(S, D)                                                     # (S, D) f32
    item = jnp.dtype(x.dtype).itemsize

    mode, tb, ts = _choose_blocks(B, S, D, x.dtype, block_bytes)

    # Double-buffered working set: 2x input block + 2x output block + 2x PE block.
    x_block_bytes = tb * ts * D * item
    pe_block_bytes = ts * D * 4
    needed = 2 * 2 * x_block_bytes + 2 * pe_block_bytes
    vmem_limit = int(min(48 << 20, max(32 << 20, 2 * needed)))

    if mode == "fold":
        # Small S*D: fold batch rows into one block; PE tile is constant.
        grid = (pl.cdiv(B, tb),)
        in_specs = [
            pl.BlockSpec((tb, S, D), lambda b: (b, 0, 0)),     # x
            pl.BlockSpec((S, D), lambda b: (0, 0)),            # pe (constant)
        ]
        out_spec = pl.BlockSpec((tb, S, D), lambda b: (b, 0, 0))
        dims = ("parallel",)
    else:
        # Large S*D: tile the sequence, squeeze the batch dim.  S-tiles outer /
        # batch inner so the PE block index is batch-invariant (revolving-buffer
        # reuse), and the larger n_s axis is available for megacore sharding.
        grid = (pl.cdiv(S, ts), B)
        in_specs = [
            pl.BlockSpec((pl.Squeezed(), ts, D), lambda s, b: (b, s, 0)),   # x
            pl.BlockSpec((ts, D), lambda s, b: (s, 0)),                     # pe
        ]
        out_spec = pl.BlockSpec((pl.Squeezed(), ts, D), lambda s, b: (b, s, 0))
        dims = ("parallel", "parallel")

    return pl.pallas_call(
        _add_pe_kernel,
        out_shape=jax.ShapeDtypeStruct((B, S, D), x.dtype),
        grid_spec=pltpu.PrefetchScalarGridSpec(
            num_scalar_prefetch=0,
            grid=grid,
            in_specs=in_specs,
            out_specs=out_spec,
        ),
        compiler_params=pltpu.CompilerParams(
            dimension_semantics=dims,
            vmem_limit_bytes=vmem_limit,
        ),
    )(x, pe)


def positional_encoding_ref(x: jax.Array) -> jax.Array:
    """Pure-JAX reference mirroring the PyTorch forward (eval-mode dropout)."""
    _, S, D = x.shape
    pe = _pe_table(S, D)
    return (x.astype(jnp.float32) + pe[None]).astype(x.dtype)


if __name__ == "__main__":
    key = jax.random.PRNGKey(0)

    # 1) f32, shapes implied by the module docstring ((batch, words, 128)).
    #    Batch-folded path: block (2, 8, 128), grid (1,).
    B, S, D = 2, 8, 128
    x = jax.random.normal(key, (B, S, D), dtype=jnp.float32)
    out = jax.block_until_ready(positional_encoding(x, dropout_p=0.1))
    ref = positional_encoding_ref(x)
    assert out.shape == (B, S, D)
    assert jnp.allclose(out, ref, atol=1e-5, rtol=1e-5), "f32 mismatch vs reference"

    # 2) bf16, batch-folded path with dtype-aware layout; f32 add, single rounding.
    x2 = jax.random.normal(jax.random.PRNGKey(1), (4, 64, 128), dtype=jnp.bfloat16)
    out2 = jax.block_until_ready(positional_encoding(x2))
    ref2 = positional_encoding_ref(x2)
    assert jnp.allclose(out2.astype(jnp.float32), ref2.astype(jnp.float32),
                        atol=2e-2, rtol=2e-2), "bf16 mismatch vs reference"

    # 3) Force the sequence-tiled (Squeezed batch) path with a small block budget.
    x3 = jax.random.normal(jax.random.PRNGKey(2), (2, 64, 128), dtype=jnp.float32)
    out3 = jax.block_until_ready(positional_encoding(x3, block_bytes=16 * 1024))
    ref3 = positional_encoding_ref(x3)
    assert jnp.allclose(out3, ref3, atol=1e-5, rtol=1e-5), "tiled-path mismatch"

    print("KERNEL_OK")
</pallas_src>

<mosaic_0001>
module attributes {stable_mosaic.version = 11 : i64} {
  func.func @_add_pe_kernel(%arg0: i32, %arg1: memref<2x8x128xf32, #tpu.memory_space<vmem>>, %arg2: memref<8x128xf32, #tpu.memory_space<vmem>>, %arg3: memref<2x8x128xf32, #tpu.memory_space<vmem>>) attributes {dimension_semantics = [#tpu.dimension_semantics<parallel>], iteration_bounds = array<i64: 1>, scalar_prefetch = 0 : i64, scratch_operands = 0 : i64, tpu.core_type = #tpu.core_type<tc>, window_params = [{transform_indices = @transform_0, window_bounds = array<i64: 2, 8, 128>}, {pipeline_mode = #tpu.pipeline_mode<synchronous>, transform_indices = @transform_1, window_bounds = array<i64: 8, 128>}, {transform_indices = @transform_2, window_bounds = array<i64: 2, 8, 128>}]} {
    %c0 = arith.constant 0 : index
    %c0_0 = arith.constant 0 : index
    %c0_1 = arith.constant 0 : index
    %0 = vector.load %arg1[%c0, %c0_0, %c0_1] : memref<2x8x128xf32, #tpu.memory_space<vmem>>, vector<2x8x128xf32>
    %c0_2 = arith.constant 0 : index
    %c0_3 = arith.constant 0 : index
    %1 = vector.load %arg2[%c0_2, %c0_3] : memref<8x128xf32, #tpu.memory_space<vmem>>, vector<8x128xf32>
    %2 = vector.shape_cast %1 : vector<8x128xf32> to vector<1x8x128xf32>
    %3 = vector.broadcast %2 : vector<1x8x128xf32> to vector<2x8x128xf32>
    %4 = arith.addf %0, %3 : vector<2x8x128xf32>
    %c0_4 = arith.constant 0 : index
    %c0_5 = arith.constant 0 : index
    %c0_6 = arith.constant 0 : index
    %5 = vector.load %arg3[%c0_4, %c0_5, %c0_6] : memref<2x8x128xf32, #tpu.memory_space<vmem>>, vector<2x8x128xf32>
    tpu.vector_store %arg3[%c0_4, %c0_5, %c0_6], %4 {strides = array<i32>} : memref<2x8x128xf32, #tpu.memory_space<vmem>>, vector<2x8x128xf32>,
    return
  }
  func.func @transform_0(%arg0: i32) -> (i32, i32, i32) {
    %c0_i32 = arith.constant 0 : i32
    %c0_i32_0 = arith.constant 0 : i32
    %c0_i32_1 = arith.constant 0 : i32
    return %arg0, %c0_i32, %c0_i32_0 : i32, i32, i32
  }
  func.func @transform_1(%arg0: i32) -> (i32, i32) {
    %c0_i32 = arith.constant 0 : i32
    %c0_i32_0 = arith.constant 0 : i32
    %c0_i32_1 = arith.constant 0 : i32
    return %c0_i32, %c0_i32_0 : i32, i32
  }
  func.func @transform_2(%arg0: i32) -> (i32, i32, i32) {
    %c0_i32 = arith.constant 0 : i32
    %c0_i32_0 = arith.constant 0 : i32
    %c0_i32_1 = arith.constant 0 : i32
    return %arg0, %c0_i32, %c0_i32_0 : i32, i32, i32
  }
}

</mosaic_0001>

<llo_original>
// kernel: tpu_custom_call.1
$region0: #{tpu_custom_call.1}
  #allocation0 [shape = 'u32[]', space=smem, size = 0x4, offset = 0x4, fixed_abs, tag = 'smem constant byte address 0x4 - core index']
  #allocation1 [shape = 'u32[72,128]{1,0:T(1,128)}', space=vmem, size = 0x9000, scoped, tag = 'internal scratch']
  %s0 = inlined_call_operand.hbm [shape: f32[2,8,128], index: 0, kind: input, shape index: {}]
  %s1 = inlined_call_operand.hbm [shape: f32[8,128], index: 1, kind: input, shape index: {}]
  %s2 = inlined_call_operand.hbm [shape: f32[2,8,128], index: 2, kind: output, shape index: {}]
  %s3 = sld [smem:[#allocation0]]
  $region26: #{tpu_custom_call.1} parent=0
    _
  %s5 = ssub.s32 1, %s3
  %s6 = scalar_select 0, %s5, %s3
  $region1: #{tpu_custom_call.1} parent=0
    #allocation2 [shape = 'u8[8192]{0}', space=vmem, size = 0x2000, scoped, tag = 'input window, operand 0, single buffered']
    #allocation3 [shape = 's32[1]{0}', space=sflag, size = 0x4, scoped, tag = 'scoped memory for tpu_custom_call.1']
    #allocation4 [shape = 's32[1]{0}', space=sflag, size = 0x4, scoped, tag = 'scoped memory for tpu_custom_call.1']
    #allocation5 [shape = 'u8[4096]{0}', space=vmem, size = 0x1000, scoped, tag = 'input window, operand 1, single buffered']
    #allocation6 [shape = 's32[1]{0}', space=sflag, size = 0x4, scoped, tag = 'scoped memory for tpu_custom_call.1']
    #allocation7 [shape = 'u8[8192]{0}', space=vmem, size = 0x2000, scoped, tag = 'output window, operand 0, single buffered']
    %7 = vsyncpa [#allocation3], 0
    %8 = vsyncpa [#allocation6], 0
    %9 = vsyncpa [#allocation4], 0
    // Predicated region
    $region2: #{tpu_custom_call.1} parent=1 // pred_check
      _
    $region3: #{tpu_custom_call.1} parent=1 // pred_check_branch
      %11 = sbr.rel (0) target = $region5
    $region4: #{tpu_custom_call.1} parent=1 // pred_region
      %13 = vsyncadd [#allocation3], 0
      %s14 = sshll.u32 %s0, 4
      %s15 = int_to_ptr.hbm [resolvable:$true] %s14
      %s16 = sshll.u32 [#allocation2], 4
      %s17 = int_to_ptr.vmem [resolvable:$true] %s16
      %22 = dma.hbm_to_vmem [thread:$0]  %s15, 256, %s17, [#allocation3], 128, 128, 8
    $region5: #{tpu_custom_call.1} parent=1 // pred_fallthru
      _
    // Predicated region
    $region6: #{tpu_custom_call.1} parent=1 // pred_check
      _
    $region7: #{tpu_custom_call.1} parent=1 // pred_check_branch
      %24 = sbr.rel (0) target = $region9
    $region8: #{tpu_custom_call.1} parent=1 // pred_region
      %26 = vsyncadd [#allocation6], 0
      %s28 = sshll.u32 %s1, 4
      %s29 = int_to_ptr.hbm [resolvable:$true] %s28
      %s30 = sshll.u32 [#allocation5], 4
      %s31 = int_to_ptr.vmem [resolvable:$true] %s30
      %33 = dma.hbm_to_vmem [thread:$0]  %s29, 128, %s31, [#allocation6]
    $region9: #{tpu_custom_call.1} parent=1 // pred_fallthru
      _
    // Predicated region
    $region10: #{tpu_custom_call.1} parent=1 // pred_check
      _
    $region11: #{tpu_custom_call.1} parent=1 // pred_check_branch
      %35 = sbr.rel (0) target = $region13
    $region12: #{tpu_custom_call.1} parent=1 // pred_region
      %37 = dma.done [#allocation3], 256
    $region13: #{tpu_custom_call.1} parent=1 // pred_fallthru
      _
    // Predicated region
    $region14: #{tpu_custom_call.1} parent=1 // pred_check
      _
    $region15: #{tpu_custom_call.1} parent=1 // pred_check_branch
      %39 = sbr.rel (0) target = $region17
    $region16: #{tpu_custom_call.1} parent=1 // pred_region
      %41 = dma.done [#allocation6], 128
    $region17: #{tpu_custom_call.1} parent=1 // pred_fallthru
      _
    %v42 = vld [vmem:[#allocation2] sm:$0xff]
    %v43 = vld [vmem:[#allocation2 + $0x8] sm:$0xff]
    %v44 = vld [vmem:[#allocation5] sm:$0xff]
    %v45 = vadd.f32 %v42, %v44
    %v46 = vadd.f32 %v43, %v44
    %47 = vst [vmem:[#allocation7] sm:$0xff] %v45
    %48 = vst [vmem:[#allocation7 + $0x8] sm:$0xff] %v46
    // Predicated region
    $region18: #{tpu_custom_call.1} parent=1 // pred_check
      _
    $region19: #{tpu_custom_call.1} parent=1 // pred_check_branch
      %50 = sbr.rel (0) target = $region21
    $region20: #{tpu_custom_call.1} parent=1 // pred_region
      %52 = vsyncadd [#allocation4], 0
      %s53 = sshll.u32 [#allocation7], 4
      %s54 = int_to_ptr.vmem [resolvable:$true] %s53
      %s55 = sshll.u32 %s2, 4
      %s56 = int_to_ptr.hbm [resolvable:$true] %s55
      %61 = dma.vmem_to_hbm [thread:$0]  %s54, 256, %s56, [#allocation4], 128, 128, 8
    $region21: #{tpu_custom_call.1} parent=1 // pred_fallthru
      _
    // Predicated region
    $region22: #{tpu_custom_call.1} parent=1 // pred_check
      _
    $region23: #{tpu_custom_call.1} parent=1 // pred_check_branch
      %63 = sbr.rel (0) target = $region25
    $region24: #{tpu_custom_call.1} parent=1 // pred_region
      %65 = dma.done [#allocation4], 256
    $region25: #{tpu_custom_call.1} parent=1 // pred_fallthru
      _
    %66 = vsyncpa [#allocation3], 1
    %67 = vsyncpa [#allocation6], 1
    %68 = vsyncpa [#allocation4], 1

</llo_original>
